<compile_context>
chip_gen: v7x
topology: tpu7x:2x2x1
jax: 0.10.0
libtpu: 0.0.40
codegen_flags: <defaults>
</compile_context>

<pallas_src>
import math

import jax
import jax.numpy as jnp
from jax.experimental import pallas as pl
from jax.experimental.pallas import tpu as pltpu


def _sincos_half_kernel(t_ref, freq_ref, out_ref):
    # t_ref:    (tile_b, 1)    float32
    # freq_ref: (1, half)      float32   (half % 128 == 0 guaranteed by wrapper)
    # out_ref:  (tile_b, dim)  float32   with dim == 2 * half
    half = freq_ref.shape[1]
    args = t_ref[...] * freq_ref[...]          # (tile_b, half), VPU broadcast mul
    # Two lane-aligned, unmasked full-width stores; EUP work is dim/row total
    # (sin on half lanes + cos on half lanes), not 2*dim as in the where-path.
    out_ref[:, :half] = jnp.sin(args)
    out_ref[:, half:] = jnp.cos(args)


def _sincos_where_kernel(t_ref, freq_ref, out_ref):
    # t_ref:    (tile_b, 1)    float32
    # freq_ref: (1, dim)       float32   ([freqs, freqs] duplicated)
    # out_ref:  (tile_b, dim)  float32
    dim = out_ref.shape[1]
    half = dim // 2
    args = t_ref[...] * freq_ref[...]          # (tile_b, dim)
    lane = jax.lax.broadcasted_iota(jnp.int32, (1, dim), dimension=1)
    # Single full-width store; sin/cos selected per lane on the VPU.
    out_ref[...] = jnp.where(lane < half, jnp.sin(args), jnp.cos(args))


def sinusoidal_position_embeddings(time, dim, *, row_tile=512):
    """Pallas equivalent of SinusoidalPositionEmbeddings(dim)(time)."""
    assert dim % 2 == 0, "dim must be even"
    assert dim >= 4, "dim must be >= 4 (half - 1 would be zero otherwise)"
    half = dim // 2

    time = time.astype(jnp.float32)
    b = time.shape[0]
    t2d = time.reshape(b, 1)  # glue reshape in plain JAX

    # Hoisted constant frequency table.
    scale = -math.log(10000.0) / (half - 1)
    freqs = jnp.exp(jnp.arange(half, dtype=jnp.float32) * scale)  # (half,)

    lane_aligned = (half % 128 == 0)
    if lane_aligned:
        kernel = _sincos_half_kernel
        freq_in = freqs.reshape(1, half)
        freq_cols = half
        transcendentals = b * dim
    else:
        kernel = _sincos_where_kernel
        freq_in = jnp.concatenate([freqs, freqs]).reshape(1, dim)
        freq_cols = dim
        transcendentals = 2 * b * dim

    cost = pl.CostEstimate(
        flops=b * dim,
        transcendentals=transcendentals,
        bytes_accessed=b * 4 + freq_cols * 4 + b * dim * 4,
    )

    # Large-B path: row grid so work pipelines and (on v7x) shards across the
    # two TensorCores. Small-B path: one full-array block (no per-step cost).
    use_grid = (b >= 2048) and (b % row_tile == 0)

    if use_grid:
        grid_spec = pltpu.PrefetchScalarGridSpec(
            num_scalar_prefetch=0,
            grid=(b // row_tile,),
            in_specs=[
                pl.BlockSpec((row_tile, 1), lambda i: (i, 0)),
                pl.BlockSpec((1, freq_cols), lambda i: (0, 0)),
            ],
            out_specs=pl.BlockSpec((row_tile, dim), lambda i: (i, 0)),
        )
        return pl.pallas_call(
            kernel,
            out_shape=jax.ShapeDtypeStruct((b, dim), jnp.float32),
            grid_spec=grid_spec,
            compiler_params=pltpu.CompilerParams(
                dimension_semantics=("parallel",)),
            cost_estimate=cost,
        )(t2d, freq_in)

    # Single block == full array, so (8,128) divisibility is not required.
    return pl.pallas_call(
        kernel,
        out_shape=jax.ShapeDtypeStruct((b, dim), jnp.float32),
        in_specs=[
            pl.BlockSpec((b, 1), lambda: (0, 0)),
            pl.BlockSpec((1, freq_cols), lambda: (0, 0)),
        ],
        out_specs=pl.BlockSpec((b, dim), lambda: (0, 0)),
        cost_estimate=cost,
    )(t2d, freq_in)


def _reference(time, dim):
    """Pure-JAX reference mirroring the PyTorch forward exactly."""
    half = dim // 2
    emb = math.log(10000.0) / (half - 1)
    emb = jnp.exp(jnp.arange(half, dtype=jnp.float32) * -emb)
    emb = time[:, None].astype(jnp.float32) * emb[None, :]
    return jnp.concatenate([jnp.sin(emb), jnp.cos(emb)], axis=-1)


if __name__ == "__main__":
    key = jax.random.PRNGKey(0)

    # 1) Small DDPM-like case (dim=32 -> where-path, unaligned half).
    batch, dim = 8, 32
    time = jax.random.uniform(key, (batch,), dtype=jnp.float32,
                              minval=0.0, maxval=1000.0)
    out = jax.block_until_ready(sinusoidal_position_embeddings(time, dim))
    ref = _reference(time, dim)
    assert out.shape == (batch, dim)
    assert jnp.allclose(out, ref, atol=1e-5, rtol=1e-5), "mismatch (small case)"

    # 2) Small batch, lane-aligned dim (half-width kernel, no grid).
    batch2, dim2 = 8, 256
    time2 = jax.random.uniform(jax.random.PRNGKey(0), (batch2,),
                               dtype=jnp.float32, minval=0.0, maxval=1000.0)
    out2 = jax.block_until_ready(sinusoidal_position_embeddings(time2, dim2))
    ref2 = _reference(time2, dim2)
    assert out2.shape == (batch2, dim2)
    assert jnp.allclose(out2, ref2, atol=1e-5, rtol=1e-5), \
        "mismatch (aligned small case)"

    # 3) Large-B case exercising the row-tiled "parallel" grid + half kernel.
    big_batch, big_dim = 4096, 256
    time_big = jax.random.uniform(jax.random.PRNGKey(0), (big_batch,),
                                  dtype=jnp.float32, minval=0.0, maxval=1000.0)
    out_big = jax.block_until_ready(
        sinusoidal_position_embeddings(time_big, big_dim))
    ref_big = _reference(time_big, big_dim)
    assert out_big.shape == (big_batch, big_dim)
    assert jnp.allclose(out_big, ref_big, atol=1e-5, rtol=1e-5), \
        "mismatch (large case)"

    print("KERNEL_OK")
</pallas_src>

<mosaic_0001>
module attributes {stable_mosaic.version = 11 : i64} {
  func.func @_sincos_where_kernel(%arg0: memref<8x1xf32, #tpu.memory_space<vmem>>, %arg1: memref<1x32xf32, #tpu.memory_space<vmem>>, %arg2: memref<8x32xf32, #tpu.memory_space<vmem>>) attributes {dimension_semantics = [], scalar_prefetch = 0 : i64, scratch_operands = 0 : i64, tpu.core_type = #tpu.core_type<tc>} {
    %c0 = arith.constant 0 : index
    %c0_0 = arith.constant 0 : index
    %0 = vector.load %arg0[%c0, %c0_0] : memref<8x1xf32, #tpu.memory_space<vmem>>, vector<8x1xf32>
    %c0_1 = arith.constant 0 : index
    %c0_2 = arith.constant 0 : index
    %1 = vector.load %arg1[%c0_1, %c0_2] : memref<1x32xf32, #tpu.memory_space<vmem>>, vector<1x32xf32>
    %2 = vector.broadcast %0 : vector<8x1xf32> to vector<8x32xf32>
    %3 = vector.broadcast %1 : vector<1x32xf32> to vector<8x32xf32>
    %4 = arith.mulf %2, %3 : vector<8x32xf32>
    %5 = tpu.iota {dimensions = array<i32: 1>} : vector<1x32xi32>
    %c16_i32 = arith.constant 16 : i32
    %6 = vector.broadcast %c16_i32 : i32 to vector<1x32xi32>
    %7 = arith.cmpi slt, %5, %6 : vector<1x32xi32>
    %8 = math.sin %4 : vector<8x32xf32>
    %9 = math.cos %4 : vector<8x32xf32>
    %10 = vector.shape_cast %7 : vector<1x32xi1> to vector<1x32xi1>
    %11 = vector.broadcast %10 : vector<1x32xi1> to vector<8x32xi1>
    %12 = arith.select %11, %8, %9 : vector<8x32xi1>, vector<8x32xf32>
    %c0_3 = arith.constant 0 : index
    %c0_4 = arith.constant 0 : index
    %13 = vector.load %arg2[%c0_3, %c0_4] : memref<8x32xf32, #tpu.memory_space<vmem>>, vector<8x32xf32>
    tpu.vector_store %arg2[%c0_3, %c0_4], %12 {strides = array<i32>} : memref<8x32xf32, #tpu.memory_space<vmem>>, vector<8x32xf32>,
    return
  }
}

</mosaic_0001>

<llo_original>
// kernel: tpu_custom_call.1
$region0: #{tpu_custom_call.1}
  #allocation0 [shape = 'u32[]', space=smem, size = 0x4, offset = 0x4, fixed_abs, tag = 'smem constant byte address 0x4 - core index']
  #allocation1 [shape = 'u32[144,128]{1,0:T(1,128)}', space=vmem, size = 0x12000, scoped, tag = 'internal scratch']
  %s0 = inlined_call_operand.vmem [shape: f32[8,1], index: 0, kind: input, shape index: {}]
  %s1 = inlined_call_operand.vmem [shape: f32[1,32], index: 1, kind: input, shape index: {}]
  %s2 = inlined_call_operand.hbm [shape: f32[8,32], index: 2, kind: output, shape index: {}]
  %s3 = sld [smem:[#allocation0]]
  $region18: #{tpu_custom_call.1} parent=0
    _
  %s5 = ssub.s32 1, %s3
  %s6 = scalar_select 0, %s5, %s3
  $region1: #{tpu_custom_call.1} parent=0
    #allocation2 [shape = 'u8[4096]{0}', space=vmem, size = 0x1000, scoped, tag = 'output window, operand 0, single buffered']
    #allocation3 [shape = 's32[1]{0}', space=sflag, size = 0x4, scoped, tag = 'scoped memory for tpu_custom_call.1']
    %7 = vsyncpa [#allocation3], 0
    // Predicated region
    $region2: #{tpu_custom_call.1} parent=1 // pred_check
      _
    $region3: #{tpu_custom_call.1} parent=1 // pred_check_branch
      %9 = sbr.rel (0) target = $region5
    $region4: #{tpu_custom_call.1} parent=1 // pred_region
      _
    $region5: #{tpu_custom_call.1} parent=1 // pred_fallthru
      _
    // Predicated region
    $region6: #{tpu_custom_call.1} parent=1 // pred_check
      _
    $region7: #{tpu_custom_call.1} parent=1 // pred_check_branch
      %11 = sbr.rel (0) target = $region9
    $region8: #{tpu_custom_call.1} parent=1 // pred_region
      _
    $region9: #{tpu_custom_call.1} parent=1 // pred_fallthru
      _
    %v12 = vld [vmem:[%s0] sm:$0xff]
    %v13 = vld [vmem:[%s1] sm:$0x1]
    %15 = vset.pattern.permute.xlu0 0
    %16 = vperm.xlu0 %15, %v12
    %v17 = vpop.permute.xlu0 %16
    %v20 = vlaneseq
    %v21 = vshrl.u32 %v20, 7
    %v22 = vsub.s32 0, %v21
    %v23 = vrot.slane %v13, %v22
    %v25 = vmul.f32 %v17, %v23
    %v26 = vlaneseq
    %v27 = vand.u32 %v26, 127
    %vm28 = vcmp.lt.s32.totalorder %v27, 16
    %v29 = vand.u32 2147483647, %v25
    %vm30 = vcmp.le.f32.partialorder %v29, 0.7853982
    %vm31 = vcmp.lt.s32.totalorder %v25, 0
    %v32 = vand.u32 %v25, 2139095040
    %v33 = vshrl.u32 %v32, 23
    %v34 = vsub.s32 %v33, 127
    %v35 = vand.u32 2147483647, %v25
    %v36 = vand.u32 %v35, 8388607
    %v37 = vor.u32 %v36, 8388608
    %v38 = vsub.s32 0, %v37
    %v39 = vadd.s32 %v34, 1
    %vm40 = vcmp.gt.s32.totalorder %v39, 0
    %v41 = vsel %vm40, %v39, 0
    %v42 = vshrl.u32 %v41, 5
    %v43 = vand.u32 %v41, 31
    %v44 = vsub.s32 32, %v43
    %v45 = vshrl.u32 683565275, %v44
    %v46 = vshll.u32 683565275, %v43
    %v47 = vshrl.u32 2475754826, %v44
    %v48 = vor.u32 %v46, %v47
    %v49 = vshll.u32 2475754826, %v43
    %v50 = vshrl.u32 2131351028, %v44
    %v51 = vor.u32 %v49, %v50
    %v52 = vshll.u32 2131351028, %v43
    %v53 = vshrl.u32 2102212464, %v44
    %v54 = vor.u32 %v52, %v53
    %v55 = vshll.u32 2102212464, %v43
    %v56 = vshrl.u32 920167782, %v44
    %v57 = vor.u32 %v55, %v56
    %v58 = vshll.u32 920167782, %v43
    %v59 = vshrl.u32 1326507024, %v44
    %v60 = vor.u32 %v58, %v59
    %vm61 = vcmp.lt.s32.totalorder %v42, 1
    %vm62 = vcmp.lt.s32.totalorder %v42, 2
    %vm63 = vcmp.lt.s32.totalorder %v42, 3
    %vm64 = vcmp.lt.s32.totalorder %v42, 4
    %v65 = vsel %vm61, %v45, %v48
    %v66 = vsel %vm64, %v54, 2102212464
    %v67 = vsel %vm63, %v51, %v66
    %v68 = vsel %vm62, %v65, %v67
    %v69 = vsel %vm61, %v48, %v51
    %v70 = vsel %vm64, %v57, 920167782
    %v71 = vsel %vm63, %v54, %v70
    %v72 = vsel %vm62, %v69, %v71
    %v73 = vsel %vm61, %v51, %v54
    %v74 = vsel %vm64, %v60, 1326507024
    %v75 = vsel %vm63, %v57, %v74
    %v76 = vsel %vm62, %v73, %v75
    %v77 = vshll.u32 %v37, 8
    %v78 = vmul.u32.u64.compose %v77, %v76
    %v79 = vextract.low.u32 %v78
    %v80 = vextract.high.u32 %v78
    %v81 = vmul.u32.u64.compose %v77, %v72
    %v82 = vextract.low.u32 %v81
    %v83 = vextract.high.u32 %v81
    %v84 = vmul.u32 %v77, %v68
    %v85 = vadd.s32 %v80, %v82
    %vm86 = vc.u32 %v80, %v82
    %v87 = vadd.s32 %v83, 1
    %v88 = vsel %vm86, %v87, %v83
    %v89 = vadd.s32 %v84, %v88
    %v90 = vadd.s32 %v89, 536870912
    %v91 = vshrl.u32 %v90, 30
    %v92 = vshll.u32 %v91, 30
    %v93 = vsub.s32 %v89, %v92
    %vm94 = vcmp.lt.s32.totalorder %v93, 0
    %v95 = vsub.s32 0, %v93
    %v96 = vsel %vm94, %v95, %v93
    %v97 = vclz %v96
    %v98 = vsub.s32 %v97, 2
    %vm99 = vcmp.gt.s32.totalorder 0, %v98
    %v100 = vsel %vm99, 0, %v98
    %v101 = vsub.s32 32, %v100
    %v102 = vshll.u32 %v93, %v100
    %v103 = vshrl.u32 %v85, %v101
    %v104 = vor.u32 %v102, %v103
    %v105 = vsub.s32 4294967266, %v100
    %v106 = vadd.s32 %v105, 127
    %v107 = vshll.u32 %v106, 23
    %v108 = vor.u32 4788187, %v107
    %v109 = vand.u32 2147483647, %v108
    %v111 = vcvt.s32.f32 %v104
    %v112 = vmul.f32 %v111, %v109
    %v113 = vxor.u32 %v112, 2147483648
    %v114 = vsel %vm31, %v113, %v112
    %v115 = vsub.s32 4, %v91
    %v116 = vsel %vm31, %v115, %v91
    %v117 = vsel %vm30, %v25, %v114
    %v118 = vsel %vm30, 0, %v116
    %v119 = vcosq.f32.pop %v117
    %v120 = vsinq.f32.pop %v117
    %vm121 = vweird.f32 %v25
    %v122 = vadd.s32 %v118, 3
    %v123 = vand.u32 %v122, 3
    %vm124 = vcmp.lt.s32.totalorder %v123, 2
    %vm125 = vcmp.eq.s32.totalorder %v123, 0
    %v126 = vxor.u32 %v120, 2147483648
    %v127 = vsel %vm125, %v119, %v126
    %vm128 = vcmp.eq.s32.totalorder %v123, 2
    %v129 = vxor.u32 %v119, 2147483648
    %v130 = vsel %vm128, %v129, %v120
    %v131 = vsel %vm124, %v127, %v130
    %v132 = vsel %vm121, nan, %v131
    %v133 = vand.u32 2147483647, %v25
    %vm134 = vcmp.le.f32.partialorder %v133, 0.7853982
    %vm135 = vcmp.lt.s32.totalorder %v25, 0
    %v136 = vand.u32 %v25, 2139095040
    %v137 = vshrl.u32 %v136, 23
    %v138 = vsub.s32 %v137, 127
    %v139 = vand.u32 2147483647, %v25
    %v140 = vand.u32 %v139, 8388607
    %v141 = vor.u32 %v140, 8388608
    %v142 = vsub.s32 0, %v141
    %v143 = vadd.s32 %v138, 1
    %vm144 = vcmp.gt.s32.totalorder %v143, 0
    %v145 = vsel %vm144, %v143, 0
    %v146 = vshrl.u32 %v145, 5
    %v147 = vand.u32 %v145, 31
    %v148 = vsub.s32 32, %v147
    %v149 = vshrl.u32 683565275, %v148
    %v150 = vshll.u32 683565275, %v147
    %v151 = vshrl.u32 2475754826, %v148
    %v152 = vor.u32 %v150, %v151
    %v153 = vshll.u32 2475754826, %v147
    %v154 = vshrl.u32 2131351028, %v148
    %v155 = vor.u32 %v153, %v154
    %v156 = vshll.u32 2131351028, %v147
    %v157 = vshrl.u32 2102212464, %v148
    %v158 = vor.u32 %v156, %v157
    %v159 = vshll.u32 2102212464, %v147
    %v160 = vshrl.u32 920167782, %v148
    %v161 = vor.u32 %v159, %v160
    %v162 = vshll.u32 920167782, %v147
    %v163 = vshrl.u32 1326507024, %v148
    %v164 = vor.u32 %v162, %v163
    %vm165 = vcmp.lt.s32.totalorder %v146, 1
    %vm166 = vcmp.lt.s32.totalorder %v146, 2
    %vm167 = vcmp.lt.s32.totalorder %v146, 3
    %vm168 = vcmp.lt.s32.totalorder %v146, 4
    %v169 = vsel %vm165, %v149, %v152
    %v170 = vsel %vm168, %v158, 2102212464
    %v171 = vsel %vm167, %v155, %v170
    %v172 = vsel %vm166, %v169, %v171
    %v173 = vsel %vm165, %v152, %v155
    %v174 = vsel %vm168, %v161, 920167782
    %v175 = vsel %vm167, %v158, %v174
    %v176 = vsel %vm166, %v173, %v175
    %v177 = vsel %vm165, %v155, %v158
    %v178 = vsel %vm168, %v164, 1326507024
    %v179 = vsel %vm167, %v161, %v178
    %v180 = vsel %vm166, %v177, %v179
    %v181 = vshll.u32 %v141, 8
    %v182 = vmul.u32.u64.compose %v181, %v180
    %v183 = vextract.low.u32 %v182
    %v184 = vextract.high.u32 %v182
    %v185 = vmul.u32.u64.compose %v181, %v176
    %v186 = vextract.low.u32 %v185
    %v187 = vextract.high.u32 %v185
    %v188 = vmul.u32 %v181, %v172
    %v189 = vadd.s32 %v184, %v186
    %vm190 = vc.u32 %v184, %v186
    %v191 = vadd.s32 %v187, 1
    %v192 = vsel %vm190, %v191, %v187
    %v193 = vadd.s32 %v188, %v192
    %v194 = vadd.s32 %v193, 536870912
    %v195 = vshrl.u32 %v194, 30
    %v196 = vshll.u32 %v195, 30
    %v197 = vsub.s32 %v193, %v196
    %vm198 = vcmp.lt.s32.totalorder %v197, 0
    %v199 = vsub.s32 0, %v197
    %v200 = vsel %vm198, %v199, %v197
    %v201 = vclz %v200
    %v202 = vsub.s32 %v201, 2
    %vm203 = vcmp.gt.s32.totalorder 0, %v202
    %v204 = vsel %vm203, 0, %v202
    %v205 = vsub.s32 32, %v204
    %v206 = vshll.u32 %v197, %v204
    %v207 = vshrl.u32 %v189, %v205
    %v208 = vor.u32 %v206, %v207
    %v209 = vsub.s32 4294967266, %v204
    %v210 = vadd.s32 %v209, 127
    %v211 = vshll.u32 %v210, 23
    %v212 = vor.u32 4788187, %v211
    %v213 = vand.u32 2147483647, %v212
    %v215 = vcvt.s32.f32 %v208
    %v216 = vmul.f32 %v215, %v213
    %v217 = vxor.u32 %v216, 2147483648
    %v218 = vsel %vm135, %v217, %v216
    %v219 = vsub.s32 4, %v195
    %v220 = vsel %vm135, %v219, %v195
    %v221 = vsel %vm134, %v25, %v218
    %v222 = vsel %vm134, 0, %v220
    %v223 = vcosq.f32.pop %v221
    %v224 = vsinq.f32.pop %v221
    %vm225 = vweird.f32 %v25
    %v226 = vand.u32 %v222, 3
    %vm227 = vcmp.lt.s32.totalorder %v226, 2
    %vm228 = vcmp.eq.s32.totalorder %v226, 0
    %v229 = vxor.u32 %v224, 2147483648
    %v230 = vsel %vm228, %v223, %v229
    %vm231 = vcmp.eq.s32.totalorder %v226, 2
    %v232 = vxor.u32 %v223, 2147483648
    %v233 = vsel %vm231, %v232, %v224
    %v234 = vsel %vm227, %v230, %v233
    %v235 = vsel %vm225, nan, %v234
    %v236 = vsel %vm28, 1, 0
    %vm237 = vcmp.eq.s32.totalorder %v236, 1
    %v238 = vsel %vm237, %v132, %v235
    %vm239 = vcmask 261120
    %240 = vst.msk [vmem:[#allocation2] sm:$0xff] %vm239, %v238
    // Predicated region
    $region10: #{tpu_custom_call.1} parent=1 // pred_check
      _
    $region11: #{tpu_custom_call.1} parent=1 // pred_check_branch
      %242 = sbr.rel (0) target = $region13
    $region12: #{tpu_custom_call.1} parent=1 // pred_region
      %s244 = ssub.s32 128, 128
      %245 = vsyncadd [#allocation3], %s244
      %s247 = sshll.u32 [#allocation2], 4
      %s248 = int_to_ptr.vmem [resolvable:$true] %s247
      %250 = dma.vmem_to_hbm [thread:$0]  %s248, 128, %s2, [#allocation3]
    $region13: #{tpu_custom_call.1} parent=1 // pred_fallthru
      _
    // Predicated region
    $region14: #{tpu_custom_call.1} parent=1 // pred_check
      _
    $region15: #{tpu_custom_call.1} parent=1 // pred_check_branch
      %252 = sbr.rel (0) target = $region17
    $region16: #{tpu_custom_call.1} parent=1 // pred_region
      %253 = dma.done [#allocation3], 128
    $region17: #{tpu_custom_call.1} parent=1 // pred_fallthru
      _
    %254 = vsyncpa [#allocation3], 1

</llo_original>
